<compile_context>
chip_gen: v7x
topology: tpu7x:2x2x1
jax: 0.10.0
libtpu: 0.0.40
codegen_flags: <defaults>
</compile_context>

<pallas_src>
import functools

import jax
import jax.numpy as jnp
from jax.experimental import pallas as pl
from jax.experimental.pallas import tpu as pltpu


def _cse_kernel(inv_hw, x_ref, w1t_ref, w2t_ref, o_ref):
    """One grid step: a (Bn, C, HW) slab of activations.

    x_ref  : (Bn, C, HW) input activations (lane axis = flattened H*W)
    w1t_ref: (C, C//2)   f32 -- Conv_Squeeze weight, transposed
    w2t_ref: (C//2, C)   f32 -- Conv_Excitation weight, transposed
    o_ref  : (Bn, C, HW)
    """
    x = x_ref[...]
    # Global average pool: lane (XLU) reduce, accumulated in f32.
    z = jnp.sum(x.astype(jnp.float32), axis=-1) * inv_hw               # (Bn, C)
    # 1x1 convs without bias == dense matmuls on the pooled vectors.
    h = jnp.dot(z, w1t_ref[...], preferred_element_type=jnp.float32)   # (Bn, C//2)
    h = jnp.maximum(h, 0.0)                                            # ReLU (VPU)
    s = jnp.dot(h, w2t_ref[...], preferred_element_type=jnp.float32)   # (Bn, C)
    s = jax.nn.sigmoid(s)                                              # EUP slot
    # Recalibrate: broadcast the per-(batch, channel) gate over all lanes.
    o_ref[...] = (x * s[:, :, None]).astype(o_ref.dtype)


def _pick_bn(N, C, HW, dtype_bytes, target_tile_bytes):
    """Largest divisor of N whose VMEM tile (including sublane/lane padding)
    stays under the target, keeping >= 2 grid steps when N >= 2."""
    c_pad = -(-C // 8) * 8                      # sublane padding in VMEM
    hw_pad = -(-HW // 128) * 128                # lane padding in VMEM
    per_batch = c_pad * hw_pad * dtype_bytes
    max_bn = max(1, target_tile_bytes // per_batch)
    if N >= 2:
        max_bn = min(max_bn, max(1, N // 2))    # >= 2 steps for megacore
    bn = 1
    for d in range(1, N + 1):
        if N % d == 0 and d <= max_bn:
            bn = d
    return max(1, bn)


def cse_forward(U, w1, w2, *, target_tile_bytes=4 << 20):
    """U: (N, C, H, W); w1: (C//2, C) Conv_Squeeze; w2: (C, C//2) Conv_Excitation."""
    N, C, H, W = U.shape
    HW = H * W
    dtype_bytes = jnp.dtype(U.dtype).itemsize

    # Metadata-only collapse of the contiguous trailing spatial dims.
    x = U.reshape(N, C, HW)

    Bn = _pick_bn(N, C, HW, dtype_bytes, target_tile_bytes)
    grid = N // Bn

    # 1x1 conv weights, pre-transposed so the kernel does (Bn,C)@(C,C//2) etc.
    w1t = jnp.transpose(w1).astype(jnp.float32)   # (C, C//2)
    w2t = jnp.transpose(w2).astype(jnp.float32)   # (C//2, C)

    cost = pl.CostEstimate(
        flops=int(2 * N * C * HW + 4 * N * C * (C // 2) + N * C * HW),
        transcendentals=int(N * C),
        bytes_accessed=int(2 * N * C * HW * dtype_bytes
                           + (w1.size + w2.size) * 4),
    )

    out = pl.pallas_call(
        functools.partial(_cse_kernel, float(1.0 / HW)),
        out_shape=jax.ShapeDtypeStruct((N, C, HW), U.dtype),
        grid_spec=pltpu.PrefetchScalarGridSpec(
            num_scalar_prefetch=0,
            grid=(grid,),
            in_specs=[
                # Multi-batch activation tile, pipelined / double-buffered.
                # Last two block dims equal the full array dims -> (8,128) rule ok.
                pl.BlockSpec((Bn, C, HW), lambda n: (n, 0, 0)),
                # Tiny constant weights: whole-array VMEM resident, no pipelining.
                pl.BlockSpec(memory_space=pltpu.MemorySpace.VMEM),
                pl.BlockSpec(memory_space=pltpu.MemorySpace.VMEM),
            ],
            out_specs=pl.BlockSpec((Bn, C, HW), lambda n: (n, 0, 0)),
        ),
        compiler_params=pltpu.CompilerParams(
            dimension_semantics=("parallel",),
            vmem_limit_bytes=64 << 20,
        ),
        cost_estimate=cost,
    )(x, w1t, w2t)

    return out.reshape(N, C, H, W)


def cse_reference(U, w1, w2):
    # Pure-JAX reference mirroring the PyTorch module.
    z = jnp.mean(U, axis=(2, 3), keepdims=True)              # (N, C, 1, 1)
    z = jnp.einsum('oc,nchw->nohw', w1, z)                   # Conv_Squeeze
    z = jax.nn.relu(z)
    z = jnp.einsum('oc,nchw->nohw', w2, z)                   # Conv_Excitation
    z = jax.nn.sigmoid(z)
    return U * z


if __name__ == "__main__":
    N, C, H, W = 2, 4, 16, 16
    key = jax.random.PRNGKey(0)
    k_u, k_w1, k_w2 = jax.random.split(key, 3)

    U = jax.random.normal(k_u, (N, C, H, W), dtype=jnp.float32)
    # Deterministic synthetic 1x1 conv weights (no bias).
    w1 = 0.2 * jax.random.normal(k_w1, (C // 2, C), dtype=jnp.float32)  # Conv_Squeeze
    w2 = 0.2 * jax.random.normal(k_w2, (C, C // 2), dtype=jnp.float32)  # Conv_Excitation

    out = cse_forward(U, w1, w2)
    out = jax.block_until_ready(out)

    ref = cse_reference(U, w1, w2)
    assert out.shape == (N, C, H, W)
    assert jnp.allclose(out, ref, atol=1e-5, rtol=1e-5), "mismatch vs reference"

    print("KERNEL_OK")
</pallas_src>

<mosaic_0001>
module attributes {stable_mosaic.version = 11 : i64} {
  func.func @_cse_kernel(%arg0: i32, %arg1: memref<1x4x256xf32, #tpu.memory_space<vmem>>, %arg2: memref<4x2xf32, #tpu.memory_space<vmem>>, %arg3: memref<2x4xf32, #tpu.memory_space<vmem>>, %arg4: memref<1x4x256xf32, #tpu.memory_space<vmem>>) attributes {dimension_semantics = [#tpu.dimension_semantics<parallel>], iteration_bounds = array<i64: 2>, scalar_prefetch = 0 : i64, scratch_operands = 0 : i64, tpu.core_type = #tpu.core_type<tc>, window_params = [{transform_indices = @transform_0, window_bounds = array<i64: 1, 4, 256>}, {pipeline_mode = #tpu.pipeline_mode<synchronous>, transform_indices = @transform_1, window_bounds = array<i64: 4, 2>}, {pipeline_mode = #tpu.pipeline_mode<synchronous>, transform_indices = @transform_2, window_bounds = array<i64: 2, 4>}, {transform_indices = @transform_3, window_bounds = array<i64: 1, 4, 256>}]} {
    %c0 = arith.constant 0 : index
    %c0_0 = arith.constant 0 : index
    %c0_1 = arith.constant 0 : index
    %0 = vector.load %arg1[%c0, %c0_0, %c0_1] : memref<1x4x256xf32, #tpu.memory_space<vmem>>, vector<1x4x256xf32>
    %cst = arith.constant dense<0.000000e+00> : vector<1x4xf32>
    %1 = vector.multi_reduction <add>, %0, %cst [2] : vector<1x4x256xf32> to vector<1x4xf32>
    %cst_2 = arith.constant 3.906250e-03 : f32
    %2 = vector.broadcast %cst_2 : f32 to vector<1x4xf32>
    %3 = arith.mulf %1, %2 : vector<1x4xf32>
    %c0_3 = arith.constant 0 : index
    %c0_4 = arith.constant 0 : index
    %4 = vector.load %arg2[%c0_3, %c0_4] : memref<4x2xf32, #tpu.memory_space<vmem>>, vector<4x2xf32>
    %cst_5 = arith.constant dense<0.000000e+00> : vector<1x2xf32>
    %5 = tpu.matmul %3, %4, %cst_5 {dimension_numbers = #tpu.dot_dimension_numbers<[1], [0], [0], [1], [0, 0, 1, 1], [], []>} : vector<1x4xf32>, vector<4x2xf32>, vector<1x2xf32> -> vector<1x2xf32>
    %cst_6 = arith.constant 0.000000e+00 : f32
    %6 = vector.broadcast %cst_6 : f32 to vector<1x2xf32>
    %7 = arith.maximumf %5, %6 : vector<1x2xf32>
    %c0_7 = arith.constant 0 : index
    %c0_8 = arith.constant 0 : index
    %8 = vector.load %arg3[%c0_7, %c0_8] : memref<2x4xf32, #tpu.memory_space<vmem>>, vector<2x4xf32>
    %cst_9 = arith.constant dense<0.000000e+00> : vector<1x4xf32>
    %9 = tpu.matmul %7, %8, %cst_9 {dimension_numbers = #tpu.dot_dimension_numbers<[1], [0], [0], [1], [0, 0, 1, 1], [], []>} : vector<1x2xf32>, vector<2x4xf32>, vector<1x4xf32> -> vector<1x4xf32>
    %10 = arith.negf %9 : vector<1x4xf32>
    %11 = math.exp %10 : vector<1x4xf32>
    %cst_10 = arith.constant 1.000000e+00 : f32
    %12 = vector.broadcast %cst_10 : f32 to vector<1x4xf32>
    %13 = arith.addf %12, %11 : vector<1x4xf32>
    %14 = arith.divf %12, %13 : vector<1x4xf32>
    %15 = vector.shape_cast %14 : vector<1x4xf32> to vector<1x4x1xf32>
    %16 = vector.broadcast %15 : vector<1x4x1xf32> to vector<1x4x256xf32>
    %17 = arith.mulf %0, %16 : vector<1x4x256xf32>
    %c0_11 = arith.constant 0 : index
    %c0_12 = arith.constant 0 : index
    %c0_13 = arith.constant 0 : index
    %18 = vector.load %arg4[%c0_11, %c0_12, %c0_13] : memref<1x4x256xf32, #tpu.memory_space<vmem>>, vector<1x4x256xf32>
    tpu.vector_store %arg4[%c0_11, %c0_12, %c0_13], %17 {strides = array<i32>} : memref<1x4x256xf32, #tpu.memory_space<vmem>>, vector<1x4x256xf32>,
    return
  }
  func.func @transform_0(%arg0: i32) -> (i32, i32, i32) {
    %c0_i32 = arith.constant 0 : i32
    %c0_i32_0 = arith.constant 0 : i32
    %c0_i32_1 = arith.constant 0 : i32
    return %arg0, %c0_i32, %c0_i32_0 : i32, i32, i32
  }
  func.func @transform_1(%arg0: i32) -> (i32, i32) {
    %c0_i32 = arith.constant 0 : i32
    %c0_i32_0 = arith.constant 0 : i32
    %c0_i32_1 = arith.constant 0 : i32
    return %c0_i32, %c0_i32_0 : i32, i32
  }
  func.func @transform_2(%arg0: i32) -> (i32, i32) {
    %c0_i32 = arith.constant 0 : i32
    %c0_i32_0 = arith.constant 0 : i32
    %c0_i32_1 = arith.constant 0 : i32
    return %c0_i32, %c0_i32_0 : i32, i32
  }
  func.func @transform_3(%arg0: i32) -> (i32, i32, i32) {
    %c0_i32 = arith.constant 0 : i32
    %c0_i32_0 = arith.constant 0 : i32
    %c0_i32_1 = arith.constant 0 : i32
    return %arg0, %c0_i32, %c0_i32_0 : i32, i32, i32
  }
}

</mosaic_0001>

<llo_original>
// kernel: tpu_custom_call.1
$region0: #{tpu_custom_call.1}
  #allocation0 [shape = 'u32[]', space=smem, size = 0x4, offset = 0x4, fixed_abs, tag = 'smem constant byte address 0x4 - core index']
  #allocation1 [shape = 'u32[144,128]{1,0:T(1,128)}', space=vmem, size = 0x12000, scoped, tag = 'internal scratch']
  %s0 = inlined_call_operand.hbm [shape: f32[2,4,256], index: 0, kind: input, shape index: {}]
  %s1 = inlined_call_operand.hbm [shape: f32[4,2], index: 1, kind: input, shape index: {}]
  %s2 = inlined_call_operand.hbm [shape: f32[2,4], index: 2, kind: input, shape index: {}]
  %s3 = inlined_call_operand.hbm [shape: f32[2,4,256], index: 3, kind: output, shape index: {}]
  %s4 = sld [smem:[#allocation0]]
  $region57: #{tpu_custom_call.1} parent=0
    _
  %s6 = ssub.s32 1, %s4
  %s7 = scalar_select 0, %s6, %s4
  $region1: #{tpu_custom_call.1} parent=0
    #allocation2 [shape = 'u8[8192]{0}', space=vmem, size = 0x2000, scoped, tag = 'input window, operand 0']
    #allocation3 [shape = 's32[2]{0}', space=sflag, size = 0x8, scoped, tag = 'scoped memory for tpu_custom_call.1']
    #allocation4 [shape = 's32[2]{0}', space=sflag, size = 0x8, scoped, tag = 'scoped memory for tpu_custom_call.1']
    #allocation5 [shape = 'u8[2048]{0}', space=vmem, size = 0x800, scoped, tag = 'input window, operand 1, single buffered']
    #allocation6 [shape = 's32[1]{0}', space=sflag, size = 0x4, scoped, tag = 'scoped memory for tpu_custom_call.1']
    #allocation7 [shape = 'u8[1024]{0}', space=vmem, size = 0x400, scoped, tag = 'input window, operand 2, single buffered']
    #allocation8 [shape = 'u8[8192]{0}', space=vmem, size = 0x2000, scoped, tag = 'output window, operand 0']
    %8 = vsyncpa [#allocation3], 0
    %s9 = scalar_lea.sflag [#allocation3], 1
    %10 = vsyncpa %s9, 0
    %11 = vsyncpa [#allocation6], 0
    %12 = vsyncpa [#allocation4], 0
    %s13 = scalar_lea.sflag [#allocation4], 1
    %14 = vsyncpa %s13, 0
    loop: start=0, step=1, limit=4
    $region2: #{tpu_custom_call.1} parent=1 // loop_pre_header
      _
    $region3: #{tpu_custom_call.1} parent=1 // loop_header
      %s16 = sphi 0, %s20
      %p17 = scmp.ge.s32.totalorder %s16, 4
      %s26 = sphi 0, %s28
      %s29 = sphi 0, %s26
      %s30 = sphi 0, %s29
      %s46 = sphi 0, %s30
      %s50 = sphi 0, %s50
      %s52 = sphi 0, %s50
      %s53 = sphi 0, %s52
      %s67 = sphi 0, %s53
      %s71 = sphi 0, %s71
      %s73 = sphi 0, %s71
      %s74 = sphi 0, %s73
      %s88 = sphi 0, %s74
      %s94 = sphi 0, %s96
      %s97 = sphi 0, %s94
      %s98 = sphi 0, %s97
      %s114 = sphi 0, %s98
    $region4: #{tpu_custom_call.1} parent=1 // loop_header_branch
      %19 = sbr.rel (%p17) target = $region8
    $region5: #{tpu_custom_call.1} parent=1 // loop_body
      %s21 = ssub.s32 %s16, 1
      %s22 = ssub.s32 %s16, 2
      %s23 = sadd.s32 %s16, 1
      %s24 = ssub.s32 %s16, %s23
      %p25 = scmp.eq.s32.totalorder %s24, 0
      %s27 = sadd.s32 %s26, 1
      %s28 = scalar_select %p25, %s26, %s27
      %p31 = pneg %p25
      %p32 = scmp.eq.s32.totalorder %s16, 1
      %p33 = por %p31, %p32
      %p34 = scmp.ne.s32.totalorder %s26, %s29
      %p35 = scmp.eq.s32.totalorder %s16, 0
      %p36 = por %p34, %p35
      %p37 = scmp.ne.s32.totalorder %s26, %s29
      %p38 = scmp.eq.s32.totalorder %s21, 1
      %p39 = por %p37, %p38
      %p40 = scmp.ne.s32.totalorder %s29, %s30
      %p41 = scmp.eq.s32.totalorder %s21, 0
      %p42 = por %p40, %p41
      %p43 = scmp.ne.s32.totalorder %s29, %s30
      %p44 = scmp.eq.s32.totalorder %s22, 1
      %p45 = por %p43, %p44
      %p47 = scmp.ne.s32.totalorder %s30, %s46
      %p48 = scmp.eq.s32.totalorder %s22, 0
      %p49 = por %p47, %p48
      %s51 = sadd.s32 %s50, 1
      %p54 = scmp.eq.s32.totalorder %s16, 1
      %p55 = scmp.ne.s32.totalorder %s50, %s52
      %p56 = scmp.eq.s32.totalorder %s16, 0
      %p57 = por %p55, %p56
      %p58 = scmp.ne.s32.totalorder %s50, %s52
      %p59 = scmp.eq.s32.totalorder %s21, 1
      %p60 = por %p58, %p59
      %p61 = scmp.ne.s32.totalorder %s52, %s53
      %p62 = scmp.eq.s32.totalorder %s21, 0
      %p63 = por %p61, %p62
      %p64 = scmp.ne.s32.totalorder %s52, %s53
      %p65 = scmp.eq.s32.totalorder %s22, 1
      %p66 = por %p64, %p65
      %p68 = scmp.ne.s32.totalorder %s53, %s67
      %p69 = scmp.eq.s32.totalorder %s22, 0
      %p70 = por %p68, %p69
      %s72 = sadd.s32 %s71, 1
      %p75 = scmp.eq.s32.totalorder %s16, 1
      %p76 = scmp.ne.s32.totalorder %s71, %s73
      %p77 = scmp.eq.s32.totalorder %s16, 0
      %p78 = por %p76, %p77
      %p79 = scmp.ne.s32.totalorder %s71, %s73
      %p80 = scmp.eq.s32.totalorder %s21, 1
      %p81 = por %p79, %p80
      %p82 = scmp.ne.s32.totalorder %s73, %s74
      %p83 = scmp.eq.s32.totalorder %s21, 0
      %p84 = por %p82, %p83
      %p85 = scmp.ne.s32.totalorder %s73, %s74
      %p86 = scmp.eq.s32.totalorder %s22, 1
      %p87 = por %p85, %p86
      %p89 = scmp.ne.s32.totalorder %s74, %s88
      %p90 = scmp.eq.s32.totalorder %s22, 0
      %p91 = por %p89, %p90
      %s92 = ssub.s32 %s16, %s23
      %p93 = scmp.eq.s32.totalorder %s92, 0
      %s95 = sadd.s32 %s94, 1
      %s96 = scalar_select %p93, %s94, %s95
      %p99 = pneg %p93
      %p100 = scmp.eq.s32.totalorder %s16, 1
      %p101 = por %p99, %p100
      %p102 = scmp.ne.s32.totalorder %s94, %s97
      %p103 = scmp.eq.s32.totalorder %s16, 0
      %p104 = por %p102, %p103
      %p105 = scmp.ne.s32.totalorder %s94, %s97
      %p106 = scmp.eq.s32.totalorder %s21, 1
      %p107 = por %p105, %p106
      %p108 = scmp.ne.s32.totalorder %s97, %s98
      %p109 = scmp.eq.s32.totalorder %s21, 0
      %p110 = por %p108, %p109
      %p111 = scmp.ne.s32.totalorder %s97, %s98
      %p112 = scmp.eq.s32.totalorder %s22, 1
      %p113 = por %p111, %p112
      %p115 = scmp.ne.s32.totalorder %s98, %s114
      %p116 = scmp.eq.s32.totalorder %s22, 0
      %p117 = por %p115, %p116
      %p118 = scmp.le.s32.totalorder 1, %s16
      %p119 = scmp.lt.s32.totalorder %s16, 3
      %p120 = pnand %p118, %p119
      %p121 = pneg %p120
      // Predicated region
      $region9: #{tpu_custom_call.1} parent=5 // pred_check
        _
      $region10: #{tpu_custom_call.1} parent=5 // pred_check_branch
        %123 = sbr.rel (%p120) target = $region12
      $region11: #{tpu_custom_call.1} parent=5 // pred_region
        %s124 = ssub.s32 %s16, 1
        // Predicated region
        $region13: #{tpu_custom_call.1} parent=11 // pred_check
          %p125 = pneg %p63
        $region14: #{tpu_custom_call.1} parent=11 // pred_check_branch
          %127 = sbr.rel (%p125) target = $region16
        $region15: #{tpu_custom_call.1} parent=11 // pred_region
          %s129 = ssub.s32 64, 64
          %130 = vsyncadd [#allocation6], %s129
          %s132 = sshll.u32 [#allocation5], 4
          %s133 = int_to_ptr.vmem [resolvable:$true] %s132
          %135 = dma.hbm_to_vmem [thread:$0]  %s1, 64, %s133, [#allocation6]
        $region16: #{tpu_custom_call.1} parent=11 // pred_fallthru
          _
        // Predicated region
        $region17: #{tpu_custom_call.1} parent=11 // pred_check
          %p136 = pneg %p84
        $region18: #{tpu_custom_call.1} parent=11 // pred_check_branch
          %138 = sbr.rel (%p136) target = $region20
        $region19: #{tpu_custom_call.1} parent=11 // pred_region
          %s140 = ssub.s32 32, 32
          %141 = vsyncadd [#allocation6], %s140
          %s143 = sshll.u32 [#allocation7], 4
          %s144 = int_to_ptr.vmem [resolvable:$true] %s143
          %146 = dma.hbm_to_vmem [thread:$0]  %s2, 32, %s144, [#allocation6]
        $region20: #{tpu_custom_call.1} parent=11 // pred_fallthru
          _
      $region12: #{tpu_custom_call.1} parent=5 // pred_fallthru
        _
      %p147 = scmp.lt.s32.totalorder %s16, 2
      // Predicated region
      $region21: #{tpu_custom_call.1} parent=5 // pred_check
        %p148 = pneg %p147
      $region22: #{tpu_custom_call.1} parent=5 // pred_check_branch
        %150 = sbr.rel (%p148) target = $region24
      $region23: #{tpu_custom_call.1} parent=5 // pred_region
        // Predicated region
        $region25: #{tpu_custom_call.1} parent=23 // pred_check
          %p151 = pneg %p36
        $region26: #{tpu_custom_call.1} parent=23 // pred_check_branch
          %153 = sbr.rel (%p151) target = $region28
        $region27: #{tpu_custom_call.1} parent=23 // pred_region
          %s154 = sand.u32 %s26, 1
          %s155 = scalar_lea.sflag [#allocation3], %s154
          %s156 = sand.u32 %s26, 1
          %s157 = smul.addr %s156, 8
          %s158 = scalar_lea.vmem [#allocation2], %s157
          %s160 = ssub.s32 128, 128
          %161 = vsyncadd %s155, %s160
          %s162 = smul.addr %s16, 2
          %s163 = smul.addr %s162, 64
          %s164 = scalar_lea.hbm %s0, %s163
          %s166 = sshll.u32 %s158, 4
          %s167 = int_to_ptr.vmem [resolvable:$true] %s166
          %169 = dma.hbm_to_vmem [thread:$0]  %s164, 128, %s167, %s155
        $region28: #{tpu_custom_call.1} parent=23 // pred_fallthru
          _
      $region24: #{tpu_custom_call.1} parent=5 // pred_fallthru
        _
      %p170 = scmp.le.s32.totalorder 1, %s16
      %p171 = scmp.lt.s32.totalorder %s16, 3
      %p172 = pnand %p170, %p171
      %p173 = pneg %p172
      // Predicated region
      $region29: #{tpu_custom_call.1} parent=5 // pred_check
        _
      $region30: #{tpu_custom_call.1} parent=5 // pred_check_branch
        %175 = sbr.rel (%p172) target = $region32
      $region31: #{tpu_custom_call.1} parent=5 // pred_region
        %s176 = ssub.s32 %s16, 1
        %s177 = sand.u32 %s29, 1
        %s178 = scalar_lea.sflag [#allocation3], %s177
        %s179 = sand.u32 %s29, 1
        %s180 = smul.addr %s179, 8
        %s181 = scalar_lea.vmem [#allocation2], %s180
        // Predicated region
        $region33: #{tpu_custom_call.1} parent=31 // pred_check
          %p182 = pneg %p42
        $region34: #{tpu_custom_call.1} parent=31 // pred_check_branch
          %184 = sbr.rel (%p182) target = $region36
        $region35: #{tpu_custom_call.1} parent=31 // pred_region
          %185 = dma.done %s178, 128
        $region36: #{tpu_custom_call.1} parent=31 // pred_fallthru
          _
        // Predicated region
        $region37: #{tpu_custom_call.1} parent=31 // pred_check
          %p186 = pneg %p63
        $region38: #{tpu_custom_call.1} parent=31 // pred_check_branch
          %188 = sbr.rel (%p186) target = $region40
        $region39: #{tpu_custom_call.1} parent=31 // pred_region
          %189 = dma.done [#allocation6], 64
        $region40: #{tpu_custom_call.1} parent=31 // pred_fallthru
          _
        // Predicated region
        $region41: #{tpu_custom_call.1} parent=31 // pred_check
          %p190 = pneg %p84
        $region42: #{tpu_custom_call.1} parent=31 // pred_check_branch
          %192 = sbr.rel (%p190) target = $region44
        $region43: #{tpu_custom_call.1} parent=31 // pred_region
          %193 = dma.done [#allocation6], 32
        $region44: #{tpu_custom_call.1} parent=31 // pred_fallthru
          _
        %s194 = sand.u32 %s29, 1
        %s195 = scalar_lea.sflag [#allocation3], %s194
        %s196 = sand.u32 %s29, 1
        %s197 = smul.addr %s196, 8
        %s198 = scalar_lea.vmem [#allocation2], %s197
        %p199 = pneg %p42
        %p200 = pneg %p39
        %p201 = pneg %p63
        %p202 = pneg %p60
        %p203 = pneg %p84
        %p204 = pneg %p81
        %p205 = pneg %p110
        %p206 = pneg %p107
        %s207 = sand.u32 %s97, 1
        %s208 = scalar_lea.sflag [#allocation4], %s207
        %s209 = sand.u32 %s97, 1
        %s210 = smul.addr %s209, 8
        %s211 = scalar_lea.vmem [#allocation8], %s210
        %v212 = vld [vmem:[%s181] sm:$0xff]
        %v214 = vcombine.high %v212, %v212
        %vm216 = vcmask 1043456
        %v217 = vsel %vm216, %v212, 0.0
        %v218 = vsel %vm216, %v214, 0.0
        %v219 = vadd.f32 %v217, %v218
        %220 = vadd.xlane.f32.xlu0 %v219
        %v221 = vpop.xlane.xlu0 %220
        %v222 = vmul.f32 %v221, 0.00390625
        %v223 = vld [vmem:[#allocation5] sm:$0xf]
        %v225 = vlaneseq
        %v226 = vand.u32 %v225, 127
        %v227 = vlaneseq
        %v228 = vshrl.u32 %v227, 7
        %v229 = vsub.s32 %v226, %v228
        %v230 = vrot.slane %v222, %v229
        %vm231 = vcmask 31744
        %v232 = vsel %vm231, %v230, 0
        %v235 = vsel %vm216, %v223, 0
        %237 = vmatprep.subr.mxu0 0.0
        %238 = vmatpush1.msra.mxu0 %v235
        %239 = vmatprep.subr.mxu0 0.0
        %240 = vmatpush1.msra.mxu0 0.0
        %241 = vmatprep.subr.mxu0 0.0
        %242 = vmatpush1.msra.mxu0 0.0
        %243 = vmatprep.subr.mxu0 0.0
        %244 = vmatpush1.msra.mxu0 0.0
        %245 = vmatprep.subr.mxu0 0.0
        %246 = vmatpush1.msra.mxu0 0.0
        %247 = vmatprep.subr.mxu0 0.0
        %248 = vmatpush1.msra.mxu0 0.0
        %249 = vmatprep.subr.mxu0 0.0
        %250 = vmatpush1.msra.mxu0 0.0
        %251 = vmatprep.subr.mxu0 0.0
        %252 = vmatpush1.msra.mxu0 0.0
        %253 = vmatprep.subr.mxu0 0.0
        %254 = vmatpush1.msra.mxu0 0.0
        %255 = vmatprep.subr.mxu0 0.0
        %256 = vmatpush1.msra.mxu0 0.0
        %257 = vmatprep.subr.mxu0 0.0
        %258 = vmatpush1.msra.mxu0 0.0
        %259 = vmatprep.subr.mxu0 0.0
        %260 = vmatpush1.msra.mxu0 0.0
        %261 = vmatprep.subr.mxu0 0.0
        %262 = vmatpush1.msra.mxu0 0.0
        %263 = vmatprep.subr.mxu0 0.0
        %264 = vmatpush1.msra.mxu0 0.0
        %265 = vmatprep.subr.mxu0 0.0
        %266 = vmatpush1.msra.mxu0 0.0
        %267 = vmatprep.subr.mxu0 0.0
        %268 = vmatpush1.msra.mxu0 0.0
        %269 = vmatprep.subr.mxu0 0.0
        %270 = vmatpush1.msra.mxu0 0.0
        %271 = vmatprep.subr.mxu0 0.0
        %272 = vmatpush1.msra.mxu0 0.0
        %273 = vmatprep.subr.mxu0 0.0
        %274 = vmatpush1.msra.mxu0 0.0
        %275 = vmatprep.subr.mxu0 0.0
        %276 = vmatpush1.msra.mxu0 0.0
        %277 = vmatprep.subr.mxu0 0.0
        %278 = vmatpush1.msra.mxu0 0.0
        %279 = vmatprep.subr.mxu0 0.0
        %280 = vmatpush1.msra.mxu0 0.0
        %281 = vmatprep.subr.mxu0 0.0
        %282 = vmatpush1.msra.mxu0 0.0
        %283 = vmatprep.subr.mxu0 0.0
        %284 = vmatpush1.msra.mxu0 0.0
        %285 = vmatprep.subr.mxu0 0.0
        %286 = vmatpush1.msra.mxu0 0.0
        %287 = vmatprep.subr.mxu0 0.0
        %288 = vmatpush1.msra.mxu0 0.0
        %289 = vmatprep.subr.mxu0 0.0
        %290 = vmatpush1.msra.mxu0 0.0
        %291 = vmatprep.subr.mxu0 0.0
        %292 = vmatpush1.msra.mxu0 0.0
        %293 = vmatprep.subr.mxu0 0.0
        %294 = vmatpush1.msra.mxu0 0.0
        %295 = vmatprep.subr.mxu0 0.0
        %296 = vmatpush1.msra.mxu0 0.0
        %297 = vmatprep.subr.mxu0 0.0
        %298 = vmatpush1.msra.mxu0 0.0
        %299 = vmatprep.subr.mxu0 0.0
        %300 = vmatpush1.msra.mxu0 0.0
        %301 = vmatprep.mubr.f32.mxu0 0.0
        %302 = vmatmul.mubr.f32.gmra.mrb[0].mxu0 %v232
        %v303 = vpop.f32.mrb[0].mxu0
        %v304 = vadd.f32 0.0, %v303
        %v305 = vpop.f32.mrb[0].mxu0
        %306 = vdwg.mxu0
        %v307 = vmax.f32 %v304, 0.0
        %v308 = vld [vmem:[#allocation7] sm:$0x3]
        %vm309 = vcmask 15360
        %v311 = vsel %vm309, %v307, 0
        %vm313 = vcmask 1041408
        %v315 = vsel %vm313, %v308, 0
        %317 = vmatprep.subr.mxu0 0.0
        %318 = vmatpush1.msra.mxu0 %v315
        %319 = vmatprep.subr.mxu0 0.0
        %320 = vmatpush1.msra.mxu0 0.0
        %321 = vmatprep.subr.mxu0 0.0
        %322 = vmatpush1.msra.mxu0 0.0
        %323 = vmatprep.subr.mxu0 0.0
        %324 = vmatpush1.msra.mxu0 0.0
        %325 = vmatprep.subr.mxu0 0.0
        %326 = vmatpush1.msra.mxu0 0.0
        %327 = vmatprep.subr.mxu0 0.0
        %328 = vmatpush1.msra.mxu0 0.0
        %329 = vmatprep.subr.mxu0 0.0
        %330 = vmatpush1.msra.mxu0 0.0
        %331 = vmatprep.subr.mxu0 0.0
        %332 = vmatpush1.msra.mxu0 0.0
        %333 = vmatprep.subr.mxu0 0.0
        %334 = vmatpush1.msra.mxu0 0.0
        %335 = vmatprep.subr.mxu0 0.0
        %336 = vmatpush1.msra.mxu0 0.0
        %337 = vmatprep.subr.mxu0 0.0
        %338 = vmatpush1.msra.mxu0 0.0
        %339 = vmatprep.subr.mxu0 0.0
        %340 = vmatpush1.msra.mxu0 0.0
        %341 = vmatprep.subr.mxu0 0.0
        %342 = vmatpush1.msra.mxu0 0.0
        %343 = vmatprep.subr.mxu0 0.0
        %344 = vmatpush1.msra.mxu0 0.0
        %345 = vmatprep.subr.mxu0 0.0
        %346 = vmatpush1.msra.mxu0 0.0
        %347 = vmatprep.subr.mxu0 0.0
        %348 = vmatpush1.msra.mxu0 0.0
        %349 = vmatprep.subr.mxu0 0.0
        %350 = vmatpush1.msra.mxu0 0.0
        %351 = vmatprep.subr.mxu0 0.0
        %352 = vmatpush1.msra.mxu0 0.0
        %353 = vmatprep.subr.mxu0 0.0
        %354 = vmatpush1.msra.mxu0 0.0
        %355 = vmatprep.subr.mxu0 0.0
        %356 = vmatpush1.msra.mxu0 0.0
        %357 = vmatprep.subr.mxu0 0.0
        %358 = vmatpush1.msra.mxu0 0.0
        %359 = vmatprep.subr.mxu0 0.0
        %360 = vmatpush1.msra.mxu0 0.0
        %361 = vmatprep.subr.mxu0 0.0
        %362 = vmatpush1.msra.mxu0 0.0
        %363 = vmatprep.subr.mxu0 0.0
        %364 = vmatpush1.msra.mxu0 0.0
        %365 = vmatprep.subr.mxu0 0.0
        %366 = vmatpush1.msra.mxu0 0.0
        %367 = vmatprep.subr.mxu0 0.0
        %368 = vmatpush1.msra.mxu0 0.0
        %369 = vmatprep.subr.mxu0 0.0
        %370 = vmatpush1.msra.mxu0 0.0
        %371 = vmatprep.subr.mxu0 0.0
        %372 = vmatpush1.msra.mxu0 0.0
        %373 = vmatprep.subr.mxu0 0.0
        %374 = vmatpush1.msra.mxu0 0.0
        %375 = vmatprep.subr.mxu0 0.0
        %376 = vmatpush1.msra.mxu0 0.0
        %377 = vmatprep.subr.mxu0 0.0
        %378 = vmatpush1.msra.mxu0 0.0
        %379 = vmatprep.subr.mxu0 0.0
        %380 = vmatpush1.msra.mxu0 0.0
        %381 = vmatprep.mubr.f32.mxu0 0.0
        %382 = vmatmul.mubr.f32.gmra.mrb[0].mxu0 %v311
        %v383 = vpop.f32.mrb[0].mxu0
        %v384 = vadd.f32 0.0, %v383
        %v385 = vpop.f32.mrb[0].mxu0
        %386 = vdwg.mxu0
        %v387 = vxor.u32 %v384, 2147483648
        %v388 = vmul.f32 %v387, 1.442695
        %v389 = vpow.pop %v388
        %v390 = vadd.f32 %v389, 1.0
        %v391 = vrcp.pop %v390
        %v392 = vmul.f32 1.0, %v391
        %v393 = vlaneseq
        %v394 = vshrl.u32 %v393, 7
        %v395 = vsub.s32 0, %v394
        %v396 = vrot.slane %v392, %v395
        %398 = vbcast.lane.b32.xlu0 %v396, 256
        %v399 = vpop.permute.xlu0 %398
        %v402 = vunpack.c.l.s4 839922192
        %v403 = vunpack.c.0.s8 %v402
        %v404 = vlaneseq
        %v405 = vshrl.u32 %v404, 7
        %v406 = vsub.s32 %v403, %v405
        %v407 = vrot.slane %v399, %v406
        %v409 = vmul.f32 %v212, %v407
        %410 = vst [vmem:[%s211] sm:$0xff] %v409
        %s411 = sand.u32 %s97, 1
        %s412 = scalar_lea.sflag [#allocation4], %s411
        %s413 = sand.u32 %s97, 1
        %s414 = smul.addr %s413, 8
        %s415 = scalar_lea.vmem [#allocation8], %s414
        // Predicated region
        $region45: #{tpu_custom_call.1} parent=31 // pred_check
          %p416 = pneg %p107
        $region46: #{tpu_custom_call.1} parent=31 // pred_check_branch
          %418 = sbr.rel (%p416) target = $region48
        $region47: #{tpu_custom_call.1} parent=31 // pred_region
          %s420 = ssub.s32 128, 128
          %421 = vsyncadd %s412, %s420
          %s422 = smul.addr %s21, 2
          %s423 = smul.addr %s422, 64
          %s424 = scalar_lea.hbm %s3, %s423
          %s426 = sshll.u32 %s415, 4
          %s427 = int_to_ptr.vmem [resolvable:$true] %s426
          %429 = dma.vmem_to_hbm [thread:$0]  %s427, 128, %s424, %s412
        $region48: #{tpu_custom_call.1} parent=31 // pred_fallthru
          _
      $region32: #{tpu_custom_call.1} parent=5 // pred_fallthru
        _
      %p430 = scmp.le.s32.totalorder 2, %s16
      // Predicated region
      $region49: #{tpu_custom_call.1} parent=5 // pred_check
        %p431 = pneg %p430
      $region50: #{tpu_custom_call.1} parent=5 // pred_check_branch
        %433 = sbr.rel (%p431) target = $region52
      $region51: #{tpu_custom_call.1} parent=5 // pred_region
        %s434 = ssub.s32 %s16, 2
        // Predicated region
        $region53: #{tpu_custom_call.1} parent=51 // pred_check
          %p435 = pneg %p113
        $region54: #{tpu_custom_call.1} parent=51 // pred_check_branch
          %437 = sbr.rel (%p435) target = $region56
        $region55: #{tpu_custom_call.1} parent=51 // pred_region
          %s438 = sand.u32 %s98, 1
          %s439 = scalar_lea.sflag [#allocation4], %s438
          %s440 = sand.u32 %s98, 1
          %s441 = smul.addr %s440, 8
          %s442 = scalar_lea.vmem [#allocation8], %s441
          %443 = dma.done %s439, 128
        $region56: #{tpu_custom_call.1} parent=51 // pred_fallthru
          _
      $region52: #{tpu_custom_call.1} parent=5 // pred_fallthru
        _
    $region6: #{tpu_custom_call.1} parent=1 // loop_footer
      %s20 = sadd.s32 1, %s16
    $region7: #{tpu_custom_call.1} parent=1 // loop_footer_branch
      %15 = sbr.rel target = $region3
    $region8: #{tpu_custom_call.1} parent=1 // loop_exit
      _
    %444 = vsyncpa [#allocation3], 1
    %s445 = scalar_lea.sflag [#allocation3], 1
    %446 = vsyncpa %s445, 1
    %447 = vsyncpa [#allocation6], 1
    %448 = vsyncpa [#allocation4], 1
    %s449 = scalar_lea.sflag [#allocation4], 1
    %450 = vsyncpa %s449, 1

</llo_original>
